<compile_context>
chip_gen: v5e
topology: v5e:2x2
jax: 0.10.0
libtpu: 0.0.40
codegen_flags: <defaults>
</compile_context>

<pallas_src>
import functools

import jax
import jax.numpy as jnp
from jax.experimental import pallas as pl
from jax.experimental.pallas import tpu as pltpu


# ---------------------------------------------------------------------------
# Kernel
# ---------------------------------------------------------------------------
def _pred_kernel(cls_x_ref, reg_x_ref,
                 w_cls_ref, b_cls_ref,
                 w_or_ref, b_or_ref,
                 out_ref, *, num_classes):
    """Fused 1x1-conv head on one (batch, spatial-tile) block.

    cls_x_ref: (cls_dim, tile_hw)       reg_x_ref: (reg_dim, tile_hw)
    w_cls_ref: (num_classes, cls_dim)   b_cls_ref: (num_classes, 1)
    w_or_ref:  (1+num_coords, reg_dim)  b_or_ref:  (1+num_coords, 1)
    out_ref:   (num_classes+1+num_coords, tile_hw)   rows = [cls | obj | reg]
    """
    cls_x = cls_x_ref[...]
    reg_x = reg_x_ref[...]

    # classification branch: (num_classes, tile_hw)
    cls = (jnp.dot(w_cls_ref[...], cls_x, preferred_element_type=jnp.float32)
           + b_cls_ref[...])

    # obj + reg fused: one MXU push for the shared reg features.
    objreg = (jnp.dot(w_or_ref[...], reg_x, preferred_element_type=jnp.float32)
              + b_or_ref[...])                    # (1+num_coords, tile_hw)

    # Single merged, lane-dense output block: two contiguous row-range stores.
    out_ref[0:num_classes, :] = cls.astype(out_ref.dtype)
    out_ref[num_classes:, :] = objreg.astype(out_ref.dtype)


# ---------------------------------------------------------------------------
# Tiling / VMEM heuristics
# ---------------------------------------------------------------------------
def _vmem_capacity_bytes():
    """Physical VMEM of the local chip; conservative fallback if unavailable."""
    try:
        info = pltpu.get_tpu_info()
        cap = getattr(info, "vmem_capacity_bytes", None)
        if cap:
            return int(cap)
    except Exception:
        pass
    return 128 * 1024 * 1024     # v5e/v6e-like default


def _default_tile_hw(vmem_cap_bytes):
    # v7x (64 MiB VMEM, ~3.2 TB/s HBM): larger tiles to amortize per-step cost.
    # v5e/v6e: 2048 already keeps fixed per-step overhead <10%.
    return 4096 if vmem_cap_bytes <= 64 * 1024 * 1024 else 2048


def _effective_tile_hw(batch, hw, tile_hw):
    """Spatial tile satisfying the (8,128) rule, with >=2 parallel grid steps
    when possible (so both v7x TensorCores get work on small pyramid levels)."""
    if hw <= tile_hw:
        t = hw                                   # full-dim block: always legal
    else:
        t = max(128, (tile_hw // 128) * 128)     # 128-multiple; ragged tail OK
    if batch * pl.cdiv(hw, t) < 2 and hw > 128:
        half = max(128, -(-(hw // 2) // 128) * 128)   # ceil(hw/2) to 128-mult
        if half < hw:
            t = half
    return t


def _pad8(n):
    return ((n + 7) // 8) * 8


def _pad128(n):
    return ((n + 127) // 128) * 128


# ---------------------------------------------------------------------------
# Wrapper
# ---------------------------------------------------------------------------
@functools.partial(jax.jit,
                   static_argnames=("tile_hw", "use_bf16", "vmem_cap_bytes"))
def _single_level_pred_impl(cls_feat, reg_feat, params, *,
                            tile_hw, use_bf16, vmem_cap_bytes):
    w_cls, b_cls, w_obj, b_obj, w_reg, b_reg = params
    B, Ccls, H, W = cls_feat.shape
    _, Creg, _, _ = reg_feat.shape
    num_classes = w_cls.shape[1]
    num_coords = w_reg.shape[1]
    HW = H * W
    c_out = num_classes + 1 + num_coords

    act_dtype = jnp.bfloat16 if use_bf16 else jnp.float32
    act_bytes = 2 if use_bf16 else 4

    # Channel-major, flattened spatial: pure reshapes, no HBM transposes.
    cls_x = cls_feat.reshape(B, Ccls, HW).astype(act_dtype)
    reg_x = reg_feat.reshape(B, Creg, HW).astype(act_dtype)

    # Weights as (C_out, C_in); obj+reg fused along the output-channel axis.
    w_cls_t = w_cls.T.astype(act_dtype)                       # (num_classes, Ccls)
    b_cls_t = b_cls.reshape(num_classes, 1).astype(jnp.float32)
    w_or_t = jnp.concatenate([w_obj, w_reg], axis=1).T.astype(act_dtype)
    b_or_t = (jnp.concatenate([b_obj, b_reg], axis=1)
              .reshape(1 + num_coords, 1).astype(jnp.float32))

    t_hw = _effective_tile_hw(B, HW, tile_hw)
    grid = (B, pl.cdiv(HW, t_hw))

    def stream_spec(C):     # per-(batch, spatial-tile) blocks
        return pl.BlockSpec((None, C, t_hw), lambda b, s: (b, 0, s))

    def resident_spec(r, c):   # weights / biases: constant index_map
        return pl.BlockSpec((r, c), lambda b, s: (0, 0))

    # Advisory cost estimate for XLA scheduling around the kernel.
    flops = 2 * B * HW * (Ccls * num_classes + Creg * (1 + num_coords))
    bytes_accessed = (act_bytes * B * HW * (Ccls + Creg)
                      + 4 * B * HW * c_out
                      + act_bytes * (num_classes * Ccls
                                     + (1 + num_coords) * Creg)
                      + 4 * c_out)
    cost = pl.CostEstimate(flops=int(flops), transcendentals=0,
                           bytes_accessed=int(bytes_accessed))

    # VMEM budget with sublane/lane padding: double-buffered streaming blocks
    # + resident weights/biases.  Only set an explicit limit when the working
    # set can exceed the smallest default scoped budget (16 MiB on v5e); cap at
    # 40 MiB on 64-MiB-VMEM parts (v7x) and 48 MiB on 128-MiB parts.
    lanes = _pad128(t_hw)
    stream_bytes = 2 * lanes * (act_bytes * (_pad8(Ccls) + _pad8(Creg))
                                + 4 * _pad8(c_out))
    weight_bytes = 2 * (act_bytes * (_pad8(num_classes) * _pad128(Ccls)
                                     + _pad8(1 + num_coords) * _pad128(Creg))
                        + 4 * (_pad8(num_classes) + _pad8(1 + num_coords)) * 128)
    vmem_est = stream_bytes + weight_bytes
    small_vmem_part = vmem_cap_bytes <= 64 * 1024 * 1024
    vmem_cap_limit = (40 if small_vmem_part else 48) * 1024 * 1024
    vmem_limit = None
    if vmem_est > 12 * 1024 * 1024:
        vmem_limit = min(vmem_cap_limit,
                         max(int(1.5 * vmem_est), 16 * 1024 * 1024))

    out = pl.pallas_call(
        functools.partial(_pred_kernel, num_classes=num_classes),
        out_shape=jax.ShapeDtypeStruct((B, c_out, HW), jnp.float32),
        grid_spec=pltpu.PrefetchScalarGridSpec(
            num_scalar_prefetch=0,
            grid=grid,
            in_specs=[
                stream_spec(Ccls),                         # cls features
                stream_spec(Creg),                         # reg features
                resident_spec(num_classes, Ccls),          # w_cls^T
                resident_spec(num_classes, 1),             # b_cls
                resident_spec(1 + num_coords, Creg),       # [w_obj; w_reg]^T
                resident_spec(1 + num_coords, 1),          # [b_obj; b_reg]
            ],
            out_specs=stream_spec(c_out),                  # merged [cls|obj|reg]
        ),
        compiler_params=pltpu.CompilerParams(
            dimension_semantics=("parallel", "parallel"),
            vmem_limit_bytes=vmem_limit),
        cost_estimate=cost,
    )(cls_x, reg_x, w_cls_t, b_cls_t, w_or_t, b_or_t)

    # Slice the merged output apart (cheap; fuses with consumers under jit)
    # and reshape back to NCHW (free reshapes).
    cls_pred = out[:, :num_classes, :].reshape(B, num_classes, H, W)
    obj_pred = out[:, num_classes:num_classes + 1, :].reshape(B, 1, H, W)
    reg_pred = out[:, num_classes + 1:, :].reshape(B, num_coords, H, W)
    return obj_pred, cls_pred, reg_pred


def single_level_pred_pallas(cls_feat, reg_feat, params, *,
                             tile_hw=None, use_bf16=False):
    """cls_feat: (B, cls_dim, H, W), reg_feat: (B, reg_dim, H, W)  (NCHW).

    Returns (obj_pred, cls_pred, reg_pred) matching SingleLevelPredLayer.forward.
    """
    vmem_cap = _vmem_capacity_bytes()
    if tile_hw is None:
        tile_hw = _default_tile_hw(vmem_cap)
    return _single_level_pred_impl(cls_feat, reg_feat, params,
                                   tile_hw=int(tile_hw),
                                   use_bf16=bool(use_bf16),
                                   vmem_cap_bytes=int(vmem_cap))


# ---------------------------------------------------------------------------
# Params / reference
# ---------------------------------------------------------------------------
def init_params(key, cls_dim, reg_dim, num_classes, num_coords=4):
    """Deterministic parameter init mirroring SingleLevelPredLayer.__init__/init_bias.

    Weight layout: [in_channels, out_channels] (matmul form of a 1x1 conv whose
    PyTorch weight is [out, in, 1, 1])."""
    k_obj, k_cls = jax.random.split(key, 2)
    init_prob = 0.01
    bias_value = -jnp.log(jnp.asarray((1.0 - init_prob) / init_prob, jnp.float32))

    # obj / cls conv weights: deterministic random (stand-in for default kaiming init)
    w_obj = (jax.random.normal(k_obj, (reg_dim, 1), jnp.float32)
             * (1.0 / jnp.sqrt(reg_dim)))
    w_cls = (jax.random.normal(k_cls, (cls_dim, num_classes), jnp.float32)
             * (1.0 / jnp.sqrt(cls_dim)))
    b_obj = jnp.full((1, 1), bias_value, jnp.float32)
    b_cls = jnp.full((1, num_classes), bias_value, jnp.float32)

    # reg conv: weight filled with 0, bias filled with 1
    w_reg = jnp.zeros((reg_dim, num_coords), jnp.float32)
    b_reg = jnp.ones((1, num_coords), jnp.float32)

    return (w_cls, b_cls, w_obj, b_obj, w_reg, b_reg)


def reference_jax(cls_feat, reg_feat, params):
    """Pure-JAX reference of the PyTorch forward (1x1 convs as einsums)."""
    w_cls, b_cls, w_obj, b_obj, w_reg, b_reg = params

    def conv1x1(x, w, b):  # x: NCHW, w: [Cin, Cout], b: [1, Cout]
        y = jnp.einsum("bchw,co->bohw", x, w)
        return y + b.reshape(1, -1, 1, 1)

    return (conv1x1(reg_feat, w_obj, b_obj),
            conv1x1(cls_feat, w_cls, b_cls),
            conv1x1(reg_feat, w_reg, b_reg))


# ---------------------------------------------------------------------------
# Self-test
# ---------------------------------------------------------------------------
if __name__ == "__main__":
    # small shapes consistent with the module
    B, H, W = 2, 16, 16
    cls_dim, reg_dim = 4, 4
    num_classes, num_coords = 8, 4

    key = jax.random.PRNGKey(0)
    k_cls, k_reg, k_param = jax.random.split(key, 3)
    cls_feat = jax.random.normal(k_cls, (B, cls_dim, H, W), jnp.float32)
    reg_feat = jax.random.normal(k_reg, (B, reg_dim, H, W), jnp.float32)

    params = init_params(k_param, cls_dim, reg_dim, num_classes, num_coords)

    obj_pred, cls_pred, reg_pred = single_level_pred_pallas(
        cls_feat, reg_feat, params)
    jax.block_until_ready((obj_pred, cls_pred, reg_pred))

    # correctness check against pure-JAX reference
    obj_ref, cls_ref, reg_ref = reference_jax(cls_feat, reg_feat, params)
    assert obj_pred.shape == (B, 1, H, W)
    assert cls_pred.shape == (B, num_classes, H, W)
    assert reg_pred.shape == (B, num_coords, H, W)
    assert jnp.allclose(obj_pred, obj_ref, atol=1e-5, rtol=1e-5)
    assert jnp.allclose(cls_pred, cls_ref, atol=1e-5, rtol=1e-5)
    assert jnp.allclose(reg_pred, reg_ref, atol=1e-5, rtol=1e-5)

    # bf16-activation path (bandwidth-bound head: ~2x fewer input bytes);
    # accumulation / bias add / outputs stay f32, so only input rounding drift.
    obj_b, cls_b, reg_b = single_level_pred_pallas(
        cls_feat, reg_feat, params, use_bf16=True)
    jax.block_until_ready((obj_b, cls_b, reg_b))
    assert jnp.allclose(obj_b, obj_ref, atol=5e-2, rtol=5e-2)
    assert jnp.allclose(cls_b, cls_ref, atol=5e-2, rtol=5e-2)
    assert jnp.allclose(reg_b, reg_ref, atol=5e-2, rtol=5e-2)

    print("KERNEL_OK")
</pallas_src>

<mosaic_0001>
module attributes {stable_mosaic.version = 11 : i64} {
  func.func @_pred_kernel(%arg0: i32, %arg1: i32, %arg2: memref<1x4x256xf32, #tpu.memory_space<vmem>>, %arg3: memref<1x4x256xf32, #tpu.memory_space<vmem>>, %arg4: memref<8x4xf32, #tpu.memory_space<vmem>>, %arg5: memref<8x1xf32, #tpu.memory_space<vmem>>, %arg6: memref<5x4xf32, #tpu.memory_space<vmem>>, %arg7: memref<5x1xf32, #tpu.memory_space<vmem>>, %arg8: memref<1x13x256xf32, #tpu.memory_space<vmem>>) attributes {dimension_semantics = [#tpu.dimension_semantics<parallel>, #tpu.dimension_semantics<parallel>], iteration_bounds = array<i64: 2, 1>, scalar_prefetch = 0 : i64, scratch_operands = 0 : i64, tpu.core_type = #tpu.core_type<tc>, window_params = [{transform_indices = @transform_0, window_bounds = array<i64: 1, 4, 256>}, {transform_indices = @transform_1, window_bounds = array<i64: 1, 4, 256>}, {pipeline_mode = #tpu.pipeline_mode<synchronous>, transform_indices = @transform_2, window_bounds = array<i64: 8, 4>}, {pipeline_mode = #tpu.pipeline_mode<synchronous>, transform_indices = @transform_3, window_bounds = array<i64: 8, 1>}, {pipeline_mode = #tpu.pipeline_mode<synchronous>, transform_indices = @transform_4, window_bounds = array<i64: 5, 4>}, {pipeline_mode = #tpu.pipeline_mode<synchronous>, transform_indices = @transform_5, window_bounds = array<i64: 5, 1>}, {transform_indices = @transform_6, window_bounds = array<i64: 1, 13, 256>}]} {
    %c0 = arith.constant 0 : index
    %c0_0 = arith.constant 0 : index
    %c0_1 = arith.constant 0 : index
    %0 = vector.load %arg2[%c0, %c0_0, %c0_1] : memref<1x4x256xf32, #tpu.memory_space<vmem>>, vector<1x4x256xf32>
    %1 = vector.shape_cast %0 : vector<1x4x256xf32> to vector<4x256xf32>
    %c0_2 = arith.constant 0 : index
    %c0_3 = arith.constant 0 : index
    %c0_4 = arith.constant 0 : index
    %2 = vector.load %arg3[%c0_2, %c0_3, %c0_4] : memref<1x4x256xf32, #tpu.memory_space<vmem>>, vector<1x4x256xf32>
    %3 = vector.shape_cast %2 : vector<1x4x256xf32> to vector<4x256xf32>
    %c0_5 = arith.constant 0 : index
    %c0_6 = arith.constant 0 : index
    %4 = vector.load %arg4[%c0_5, %c0_6] : memref<8x4xf32, #tpu.memory_space<vmem>>, vector<8x4xf32>
    %cst = arith.constant dense<0.000000e+00> : vector<8x256xf32>
    %5 = tpu.matmul %4, %1, %cst {dimension_numbers = #tpu.dot_dimension_numbers<[1], [0], [0], [1], [0, 0, 1, 1], [], []>} : vector<8x4xf32>, vector<4x256xf32>, vector<8x256xf32> -> vector<8x256xf32>
    %c0_7 = arith.constant 0 : index
    %c0_8 = arith.constant 0 : index
    %6 = vector.load %arg5[%c0_7, %c0_8] : memref<8x1xf32, #tpu.memory_space<vmem>>, vector<8x1xf32>
    %7 = vector.broadcast %6 : vector<8x1xf32> to vector<8x256xf32>
    %8 = arith.addf %5, %7 : vector<8x256xf32>
    %c0_9 = arith.constant 0 : index
    %c0_10 = arith.constant 0 : index
    %9 = vector.load %arg6[%c0_9, %c0_10] : memref<5x4xf32, #tpu.memory_space<vmem>>, vector<5x4xf32>
    %cst_11 = arith.constant dense<0.000000e+00> : vector<5x256xf32>
    %10 = tpu.matmul %9, %3, %cst_11 {dimension_numbers = #tpu.dot_dimension_numbers<[1], [0], [0], [1], [0, 0, 1, 1], [], []>} : vector<5x4xf32>, vector<4x256xf32>, vector<5x256xf32> -> vector<5x256xf32>
    %c0_12 = arith.constant 0 : index
    %c0_13 = arith.constant 0 : index
    %11 = vector.load %arg7[%c0_12, %c0_13] : memref<5x1xf32, #tpu.memory_space<vmem>>, vector<5x1xf32>
    %12 = vector.broadcast %11 : vector<5x1xf32> to vector<5x256xf32>
    %13 = arith.addf %10, %12 : vector<5x256xf32>
    %c0_14 = arith.constant 0 : index
    %c0_15 = arith.constant 0 : index
    %c0_16 = arith.constant 0 : index
    %14 = vector.load %arg8[%c0_14, %c0_15, %c0_16] : memref<1x13x256xf32, #tpu.memory_space<vmem>>, vector<1x8x256xf32>
    %15 = vector.shape_cast %14 : vector<1x8x256xf32> to vector<8x256xf32>
    %16 = vector.shape_cast %8 : vector<8x256xf32> to vector<1x8x256xf32>
    tpu.vector_store %arg8[%c0_14, %c0_15, %c0_16], %16 {strides = array<i32>} : memref<1x13x256xf32, #tpu.memory_space<vmem>>, vector<1x8x256xf32>,
    %c0_17 = arith.constant 0 : index
    %c8 = arith.constant 8 : index
    %c0_18 = arith.constant 0 : index
    %17 = vector.load %arg8[%c0_17, %c8, %c0_18] : memref<1x13x256xf32, #tpu.memory_space<vmem>>, vector<1x5x256xf32>
    %18 = vector.shape_cast %17 : vector<1x5x256xf32> to vector<5x256xf32>
    %19 = vector.shape_cast %13 : vector<5x256xf32> to vector<1x5x256xf32>
    tpu.vector_store %arg8[%c0_17, %c8, %c0_18], %19 {strides = array<i32>} : memref<1x13x256xf32, #tpu.memory_space<vmem>>, vector<1x5x256xf32>,
    return
  }
  func.func @transform_0(%arg0: i32, %arg1: i32) -> (i32, i32, i32) {
    %c0_i32 = arith.constant 0 : i32
    %c0_i32_0 = arith.constant 0 : i32
    return %arg0, %c0_i32, %arg1 : i32, i32, i32
  }
  func.func @transform_1(%arg0: i32, %arg1: i32) -> (i32, i32, i32) {
    %c0_i32 = arith.constant 0 : i32
    %c0_i32_0 = arith.constant 0 : i32
    return %arg0, %c0_i32, %arg1 : i32, i32, i32
  }
  func.func @transform_2(%arg0: i32, %arg1: i32) -> (i32, i32) {
    %c0_i32 = arith.constant 0 : i32
    %c0_i32_0 = arith.constant 0 : i32
    %c0_i32_1 = arith.constant 0 : i32
    return %c0_i32, %c0_i32_0 : i32, i32
  }
  func.func @transform_3(%arg0: i32, %arg1: i32) -> (i32, i32) {
    %c0_i32 = arith.constant 0 : i32
    %c0_i32_0 = arith.constant 0 : i32
    %c0_i32_1 = arith.constant 0 : i32
    return %c0_i32, %c0_i32_0 : i32, i32
  }
  func.func @transform_4(%arg0: i32, %arg1: i32) -> (i32, i32) {
    %c0_i32 = arith.constant 0 : i32
    %c0_i32_0 = arith.constant 0 : i32
    %c0_i32_1 = arith.constant 0 : i32
    return %c0_i32, %c0_i32_0 : i32, i32
  }
  func.func @transform_5(%arg0: i32, %arg1: i32) -> (i32, i32) {
    %c0_i32 = arith.constant 0 : i32
    %c0_i32_0 = arith.constant 0 : i32
    %c0_i32_1 = arith.constant 0 : i32
    return %c0_i32, %c0_i32_0 : i32, i32
  }
  func.func @transform_6(%arg0: i32, %arg1: i32) -> (i32, i32, i32) {
    %c0_i32 = arith.constant 0 : i32
    %c0_i32_0 = arith.constant 0 : i32
    return %arg0, %c0_i32, %arg1 : i32, i32, i32
  }
}

</mosaic_0001>

<llo_original>
// kernel: _single_level_pred_impl.1
$region0: #{_single_level_pred_impl.1}
  #allocation0 [shape = 'u32[]', space=smem, size = 0x4, offset = 0x4, fixed_abs, tag = 'smem constant byte address 0x4 - core index']
  #allocation1 [shape = 'u32[72,128]{1,0:T(1,128)}', space=vmem, size = 0x9000, scoped, tag = 'internal scratch']
  %s0 = inlined_call_operand.vmem [shape: f32[2,4,256], index: 0, kind: input, shape index: {}]
  %s1 = inlined_call_operand.vmem [shape: f32[2,4,256], index: 1, kind: input, shape index: {}]
  %s2 = inlined_call_operand.vmem [shape: f32[8,4], index: 2, kind: input, shape index: {}]
  %s3 = inlined_call_operand.vmem [shape: f32[8,1], index: 3, kind: input, shape index: {}]
  %s4 = inlined_call_operand.vmem [shape: f32[5,4], index: 4, kind: input, shape index: {}]
  %s5 = inlined_call_operand.vmem [shape: f32[5,1], index: 5, kind: input, shape index: {}]
  %s6 = inlined_call_operand.vmem [shape: f32[2,13,256], index: 6, kind: output, shape index: {}]
  %s7 = sld [smem:[#allocation0]]
  $region57: #{_single_level_pred_impl.1} parent=0
    _
  %s9 = ssub.s32 1, %s7
  %s10 = scalar_select 0, %s9, %s7
  loop: start=0, step=1, limit=4
  $region2: #{_single_level_pred_impl.1} parent=0 // loop_pre_header
    _
  $region3: #{_single_level_pred_impl.1} parent=0 // loop_header
    %s12 = sphi 0, %s16
    %p13 = scmp.ge.s32.totalorder %s12, 4
    %s19 = sphi 0, %s31
    %s20 = sphi 0, %s27
    %s21 = sphi 0, %s19
    %s22 = sphi 0, %s20
    %s23 = sphi 0, %s21
    %s24 = sphi 0, %s22
    %s36 = sphi 0, %s38
    %s39 = sphi 0, %s36
    %s40 = sphi 0, %s39
    %s56 = sphi 0, %s40
    %s64 = sphi 0, %s66
    %s67 = sphi 0, %s64
    %s68 = sphi 0, %s67
    %s84 = sphi 0, %s68
    %s88 = sphi 0, %s88
    %s90 = sphi 0, %s88
    %s91 = sphi 0, %s90
    %s105 = sphi 0, %s91
    %s109 = sphi 0, %s109
    %s111 = sphi 0, %s109
    %s112 = sphi 0, %s111
    %s126 = sphi 0, %s112
    %s130 = sphi 0, %s130
    %s132 = sphi 0, %s130
    %s133 = sphi 0, %s132
    %s147 = sphi 0, %s133
    %s151 = sphi 0, %s151
    %s153 = sphi 0, %s151
    %s154 = sphi 0, %s153
    %s168 = sphi 0, %s154
    %s176 = sphi 0, %s178
    %s179 = sphi 0, %s176
    %s180 = sphi 0, %s179
    %s196 = sphi 0, %s180
  $region4: #{_single_level_pred_impl.1} parent=0 // loop_header_branch
    %15 = sbr.rel (%p13) target = $region8
  $region5: #{_single_level_pred_impl.1} parent=0 // loop_body
    %s17 = ssub.s32 %s12, 1
    %s18 = ssub.s32 %s12, 2
    %s25 = sadd.s32 1, %s20
    %p26 = scmp.ge.s32.totalorder %s25, 1
    %s27 = scalar_select %p26, 0, %s25
    %s28 = sadd.s32 1, %s19
    %s29 = scalar_select %p26, %s28, %s19
    %p30 = scmp.ge.s32.totalorder %s29, 2
    %s31 = scalar_select %p30, 0, %s29
    %s32 = ssub.s32 %s19, %s31
    %s33 = ssub.s32 %s20, %s27
    %s34 = sor.u32 %s32, %s33
    %p35 = scmp.eq.s32.totalorder %s34, 0
    %s37 = sadd.s32 %s36, 1
    %s38 = scalar_select %p35, %s36, %s37
    %p41 = pneg %p35
    %p42 = scmp.eq.s32.totalorder %s12, 1
    %p43 = por %p41, %p42
    %p44 = scmp.ne.s32.totalorder %s36, %s39
    %p45 = scmp.eq.s32.totalorder %s12, 0
    %p46 = por %p44, %p45
    %p47 = scmp.ne.s32.totalorder %s36, %s39
    %p48 = scmp.eq.s32.totalorder %s17, 1
    %p49 = por %p47, %p48
    %p50 = scmp.ne.s32.totalorder %s39, %s40
    %p51 = scmp.eq.s32.totalorder %s17, 0
    %p52 = por %p50, %p51
    %p53 = scmp.ne.s32.totalorder %s39, %s40
    %p54 = scmp.eq.s32.totalorder %s18, 1
    %p55 = por %p53, %p54
    %p57 = scmp.ne.s32.totalorder %s40, %s56
    %p58 = scmp.eq.s32.totalorder %s18, 0
    %p59 = por %p57, %p58
    %s60 = ssub.s32 %s19, %s31
    %s61 = ssub.s32 %s20, %s27
    %s62 = sor.u32 %s60, %s61
    %p63 = scmp.eq.s32.totalorder %s62, 0
    %s65 = sadd.s32 %s64, 1
    %s66 = scalar_select %p63, %s64, %s65
    %p69 = pneg %p63
    %p70 = scmp.eq.s32.totalorder %s12, 1
    %p71 = por %p69, %p70
    %p72 = scmp.ne.s32.totalorder %s64, %s67
    %p73 = scmp.eq.s32.totalorder %s12, 0
    %p74 = por %p72, %p73
    %p75 = scmp.ne.s32.totalorder %s64, %s67
    %p76 = scmp.eq.s32.totalorder %s17, 1
    %p77 = por %p75, %p76
    %p78 = scmp.ne.s32.totalorder %s67, %s68
    %p79 = scmp.eq.s32.totalorder %s17, 0
    %p80 = por %p78, %p79
    %p81 = scmp.ne.s32.totalorder %s67, %s68
    %p82 = scmp.eq.s32.totalorder %s18, 1
    %p83 = por %p81, %p82
    %p85 = scmp.ne.s32.totalorder %s68, %s84
    %p86 = scmp.eq.s32.totalorder %s18, 0
    %p87 = por %p85, %p86
    %s89 = sadd.s32 %s88, 1
    %p92 = scmp.eq.s32.totalorder %s12, 1
    %p93 = scmp.ne.s32.totalorder %s88, %s90
    %p94 = scmp.eq.s32.totalorder %s12, 0
    %p95 = por %p93, %p94
    %p96 = scmp.ne.s32.totalorder %s88, %s90
    %p97 = scmp.eq.s32.totalorder %s17, 1
    %p98 = por %p96, %p97
    %p99 = scmp.ne.s32.totalorder %s90, %s91
    %p100 = scmp.eq.s32.totalorder %s17, 0
    %p101 = por %p99, %p100
    %p102 = scmp.ne.s32.totalorder %s90, %s91
    %p103 = scmp.eq.s32.totalorder %s18, 1
    %p104 = por %p102, %p103
    %p106 = scmp.ne.s32.totalorder %s91, %s105
    %p107 = scmp.eq.s32.totalorder %s18, 0
    %p108 = por %p106, %p107
    %s110 = sadd.s32 %s109, 1
    %p113 = scmp.eq.s32.totalorder %s12, 1
    %p114 = scmp.ne.s32.totalorder %s109, %s111
    %p115 = scmp.eq.s32.totalorder %s12, 0
    %p116 = por %p114, %p115
    %p117 = scmp.ne.s32.totalorder %s109, %s111
    %p118 = scmp.eq.s32.totalorder %s17, 1
    %p119 = por %p117, %p118
    %p120 = scmp.ne.s32.totalorder %s111, %s112
    %p121 = scmp.eq.s32.totalorder %s17, 0
    %p122 = por %p120, %p121
    %p123 = scmp.ne.s32.totalorder %s111, %s112
    %p124 = scmp.eq.s32.totalorder %s18, 1
    %p125 = por %p123, %p124
    %p127 = scmp.ne.s32.totalorder %s112, %s126
    %p128 = scmp.eq.s32.totalorder %s18, 0
    %p129 = por %p127, %p128
    %s131 = sadd.s32 %s130, 1
    %p134 = scmp.eq.s32.totalorder %s12, 1
    %p135 = scmp.ne.s32.totalorder %s130, %s132
    %p136 = scmp.eq.s32.totalorder %s12, 0
    %p137 = por %p135, %p136
    %p138 = scmp.ne.s32.totalorder %s130, %s132
    %p139 = scmp.eq.s32.totalorder %s17, 1
    %p140 = por %p138, %p139
    %p141 = scmp.ne.s32.totalorder %s132, %s133
    %p142 = scmp.eq.s32.totalorder %s17, 0
    %p143 = por %p141, %p142
    %p144 = scmp.ne.s32.totalorder %s132, %s133
    %p145 = scmp.eq.s32.totalorder %s18, 1
    %p146 = por %p144, %p145
    %p148 = scmp.ne.s32.totalorder %s133, %s147
    %p149 = scmp.eq.s32.totalorder %s18, 0
    %p150 = por %p148, %p149
    %s152 = sadd.s32 %s151, 1
    %p155 = scmp.eq.s32.totalorder %s12, 1
    %p156 = scmp.ne.s32.totalorder %s151, %s153
    %p157 = scmp.eq.s32.totalorder %s12, 0
    %p158 = por %p156, %p157
    %p159 = scmp.ne.s32.totalorder %s151, %s153
    %p160 = scmp.eq.s32.totalorder %s17, 1
    %p161 = por %p159, %p160
    %p162 = scmp.ne.s32.totalorder %s153, %s154
    %p163 = scmp.eq.s32.totalorder %s17, 0
    %p164 = por %p162, %p163
    %p165 = scmp.ne.s32.totalorder %s153, %s154
    %p166 = scmp.eq.s32.totalorder %s18, 1
    %p167 = por %p165, %p166
    %p169 = scmp.ne.s32.totalorder %s154, %s168
    %p170 = scmp.eq.s32.totalorder %s18, 0
    %p171 = por %p169, %p170
    %s172 = ssub.s32 %s19, %s31
    %s173 = ssub.s32 %s20, %s27
    %s174 = sor.u32 %s172, %s173
    %p175 = scmp.eq.s32.totalorder %s174, 0
    %s177 = sadd.s32 %s176, 1
    %s178 = scalar_select %p175, %s176, %s177
    %p181 = pneg %p175
    %p182 = scmp.eq.s32.totalorder %s12, 1
    %p183 = por %p181, %p182
    %p184 = scmp.ne.s32.totalorder %s176, %s179
    %p185 = scmp.eq.s32.totalorder %s12, 0
    %p186 = por %p184, %p185
    %p187 = scmp.ne.s32.totalorder %s176, %s179
    %p188 = scmp.eq.s32.totalorder %s17, 1
    %p189 = por %p187, %p188
    %p190 = scmp.ne.s32.totalorder %s179, %s180
    %p191 = scmp.eq.s32.totalorder %s17, 0
    %p192 = por %p190, %p191
    %p193 = scmp.ne.s32.totalorder %s179, %s180
    %p194 = scmp.eq.s32.totalorder %s18, 1
    %p195 = por %p193, %p194
    %p197 = scmp.ne.s32.totalorder %s180, %s196
    %p198 = scmp.eq.s32.totalorder %s18, 0
    %p199 = por %p197, %p198
    %p200 = scmp.le.s32.totalorder 1, %s12
    %p201 = scmp.lt.s32.totalorder %s12, 3
    %p202 = pnand %p200, %p201
    %p203 = pneg %p202
    // Predicated region
    $region9: #{_single_level_pred_impl.1} parent=5 // pred_check
      _
    $region10: #{_single_level_pred_impl.1} parent=5 // pred_check_branch
      %205 = sbr.rel (%p202) target = $region12
    $region11: #{_single_level_pred_impl.1} parent=5 // pred_region
      %s206 = ssub.s32 %s12, 1
      // Predicated region
      $region13: #{_single_level_pred_impl.1} parent=11 // pred_check
        %p207 = pneg %p101
      $region14: #{_single_level_pred_impl.1} parent=11 // pred_check_branch
        %209 = sbr.rel (%p207) target = $region16
      $region15: #{_single_level_pred_impl.1} parent=11 // pred_region
        _
      $region16: #{_single_level_pred_impl.1} parent=11 // pred_fallthru
        _
      // Predicated region
      $region17: #{_single_level_pred_impl.1} parent=11 // pred_check
        %p210 = pneg %p122
      $region18: #{_single_level_pred_impl.1} parent=11 // pred_check_branch
        %212 = sbr.rel (%p210) target = $region20
      $region19: #{_single_level_pred_impl.1} parent=11 // pred_region
        _
      $region20: #{_single_level_pred_impl.1} parent=11 // pred_fallthru
        _
      // Predicated region
      $region21: #{_single_level_pred_impl.1} parent=11 // pred_check
        %p213 = pneg %p143
      $region22: #{_single_level_pred_impl.1} parent=11 // pred_check_branch
        %215 = sbr.rel (%p213) target = $region24
      $region23: #{_single_level_pred_impl.1} parent=11 // pred_region
        _
      $region24: #{_single_level_pred_impl.1} parent=11 // pred_fallthru
        _
      // Predicated region
      $region25: #{_single_level_pred_impl.1} parent=11 // pred_check
        %p216 = pneg %p164
      $region26: #{_single_level_pred_impl.1} parent=11 // pred_check_branch
        %218 = sbr.rel (%p216) target = $region28
      $region27: #{_single_level_pred_impl.1} parent=11 // pred_region
        _
      $region28: #{_single_level_pred_impl.1} parent=11 // pred_fallthru
        _
    $region12: #{_single_level_pred_impl.1} parent=5 // pred_fallthru
      _
    %p219 = scmp.lt.s32.totalorder %s12, 2
    // Predicated region
    $region29: #{_single_level_pred_impl.1} parent=5 // pred_check
      %p220 = pneg %p219
    $region30: #{_single_level_pred_impl.1} parent=5 // pred_check_branch
      %222 = sbr.rel (%p220) target = $region32
    $region31: #{_single_level_pred_impl.1} parent=5 // pred_region
      // Predicated region
      $region33: #{_single_level_pred_impl.1} parent=31 // pred_check
        %p223 = pneg %p46
      $region34: #{_single_level_pred_impl.1} parent=31 // pred_check_branch
        %225 = sbr.rel (%p223) target = $region36
      $region35: #{_single_level_pred_impl.1} parent=31 // pred_region
        %s226 = smul.u32 2, %s20
        %p227 = scmp.lt.s32.totalorder %s19, 1
        %s228 = scalar_select %p227, %s19, 1
        %p229 = scmp.lt.s32.totalorder %s226, 1
        %s230 = scalar_select %p229, %s226, 1
        %s231 = smul.addr %s228, 2
        %s232 = sadd.s32 %s230, %s231
        %s233 = smul.addr %s232, 4
        %s234 = scalar_lea.vmem %s0, %s233
        %s235 = smul.u32 2, %s20
      $region36: #{_single_level_pred_impl.1} parent=31 // pred_fallthru
        _
      // Predicated region
      $region37: #{_single_level_pred_impl.1} parent=31 // pred_check
        %p236 = pneg %p74
      $region38: #{_single_level_pred_impl.1} parent=31 // pred_check_branch
        %238 = sbr.rel (%p236) target = $region40
      $region39: #{_single_level_pred_impl.1} parent=31 // pred_region
        %s239 = smul.u32 2, %s20
        %p240 = scmp.lt.s32.totalorder %s19, 1
        %s241 = scalar_select %p240, %s19, 1
        %p242 = scmp.lt.s32.totalorder %s239, 1
        %s243 = scalar_select %p242, %s239, 1
        %s244 = smul.addr %s241, 2
        %s245 = sadd.s32 %s243, %s244
        %s246 = smul.addr %s245, 4
        %s247 = scalar_lea.vmem %s1, %s246
        %s248 = smul.u32 2, %s20
      $region40: #{_single_level_pred_impl.1} parent=31 // pred_fallthru
        _
    $region32: #{_single_level_pred_impl.1} parent=5 // pred_fallthru
      _
    %p249 = scmp.le.s32.totalorder 1, %s12
    %p250 = scmp.lt.s32.totalorder %s12, 3
    %p251 = pnand %p249, %p250
    %p252 = pneg %p251
    // Predicated region
    $region41: #{_single_level_pred_impl.1} parent=5 // pred_check
      _
    $region42: #{_single_level_pred_impl.1} parent=5 // pred_check_branch
      %254 = sbr.rel (%p251) target = $region44
    $region43: #{_single_level_pred_impl.1} parent=5 // pred_region
      %s255 = ssub.s32 %s12, 1
      %s256 = smul.u32 2, %s22
      %p257 = scmp.lt.s32.totalorder %s21, 1
      %s258 = scalar_select %p257, %s21, 1
      %p259 = scmp.lt.s32.totalorder %s256, 1
      %s260 = scalar_select %p259, %s256, 1
      %s261 = smul.addr %s258, 2
      %s262 = sadd.s32 %s260, %s261
      %s263 = smul.addr %s262, 4
      %s264 = scalar_lea.vmem %s0, %s263
      %p265 = pneg %p52
      %p266 = pneg %p49
      %s267 = smul.u32 2, %s22
      %p268 = scmp.lt.s32.totalorder %s21, 1
      %s269 = scalar_select %p268, %s21, 1
      %p270 = scmp.lt.s32.totalorder %s267, 1
      %s271 = scalar_select %p270, %s267, 1
      %s272 = smul.addr %s269, 2
      %s273 = sadd.s32 %s271, %s272
      %s274 = smul.addr %s273, 4
      %s275 = scalar_lea.vmem %s1, %s274
      %p276 = pneg %p80
      %p277 = pneg %p77
      %p278 = pneg %p101
      %p279 = pneg %p98
      %p280 = pneg %p122
      %p281 = pneg %p119
      %p282 = pneg %p143
      %p283 = pneg %p140
      %p284 = pneg %p164
      %p285 = pneg %p161
      %p286 = pneg %p192
      %p287 = pneg %p189
      %s288 = smul.u32 2, %s22
      %p289 = scmp.lt.s32.totalorder %s21, 1
      %s290 = scalar_select %p289, %s21, 1
      %p291 = scmp.lt.s32.totalorder %s288, 1
      %s292 = scalar_select %p291, %s288, 1
      %s293 = smul.addr %s290, 4
      %s294 = sadd.s32 %s292, %s293
      %s295 = smul.addr %s294, 8
      %s296 = scalar_lea.vmem %s6, %s295
      %s297 = smul.u32 2, %s22
      %p298 = scmp.lt.s32.totalorder %s21, 1
      %s299 = scalar_select %p298, %s21, 1
      %p300 = scmp.lt.s32.totalorder %s297, 1
      %s301 = scalar_select %p300, %s297, 1
      %s302 = smul.addr %s299, 2
      %s303 = sadd.s32 %s301, %s302
      %s304 = smul.addr %s303, 4
      %s305 = scalar_lea.vmem %s0, %s304
      %s306 = smul.u32 2, %s22
      %s307 = smul.u32 2, %s22
      %p308 = scmp.lt.s32.totalorder %s21, 1
      %s309 = scalar_select %p308, %s21, 1
      %p310 = scmp.lt.s32.totalorder %s307, 1
      %s311 = scalar_select %p310, %s307, 1
      %s312 = smul.addr %s309, 2
      %s313 = sadd.s32 %s311, %s312
      %s314 = smul.addr %s313, 4
      %s315 = scalar_lea.vmem %s1, %s314
      %s316 = smul.u32 2, %s22
      %s317 = smul.u32 2, %s22
      %p318 = scmp.lt.s32.totalorder %s21, 1
      %s319 = scalar_select %p318, %s21, 1
      %p320 = scmp.lt.s32.totalorder %s317, 1
      %s321 = scalar_select %p320, %s317, 1
      %s322 = smul.addr %s319, 4
      %s323 = sadd.s32 %s321, %s322
      %s324 = smul.addr %s323, 8
      %s325 = scalar_lea.vmem %s6, %s324
      %s326 = smul.u32 2, %s22
      %v327 = vld [vmem:[%s305] sm:$0xff]
      %v328 = vld [vmem:[%s315] sm:$0xff]
      %v329 = vld [vmem:[%s2] sm:$0xff]
      %v330 = vld [vmem:[%s3] sm:$0xff]
      %332 = vset.pattern.permute.xlu0 0
      %333 = vperm.xlu0 %332, %v330
      %v334 = vpop.permute.xlu0 %333
      %337 = vst [vmem:[#allocation1] ss:$2 sm:$0xff] %v327
      %v338 = vld.sshfl [vmem:[#allocation1] sm:$0xff pattern:$0x75316420]
      %v339 = vld.sshfl [vmem:[#allocation1 + $0x8] sm:$0xff pattern:$0x75316420]
      %vm340 = vcmask 31744
      %v342 = vsel %vm340, %v329, 0
      %vm344 = vcmask 1043456
      %v345 = vsel %vm344, %v338, 0
      %v347 = vsel %vm344, %v339, 0
      %349 = vmatpush.msra.mxu0 0.0
      %350 = vmatpush.msra.mxu0 0.0
      %351 = vmatpush.msra.mxu0 0.0
      %352 = vmatpush.msra.mxu0 0.0
      %353 = vmatpush.msra.mxu0 0.0
      %354 = vmatpush.msra.mxu0 0.0
      %355 = vmatpush.msra.mxu0 0.0
      %356 = vmatpush.msra.mxu0 0.0
      %357 = vmatpush.msra.mxu0 0.0
      %358 = vmatpush.msra.mxu0 0.0
      %359 = vmatpush.msra.mxu0 0.0
      %360 = vmatpush.msra.mxu0 0.0
      %361 = vmatpush.msra.mxu0 0.0
      %362 = vmatpush.msra.mxu0 0.0
      %363 = vmatpush.msra.mxu0 0.0
      %364 = vmatpush.msra.mxu0 %v345
      %365 = vmatmul.f32.gmra.mxu0 %v342
      %v366 = vpop.f32.mrf.mxu0
      %v367 = vadd.f32 %v334, %v366
      %368 = vdwg.mxu0
      %369 = vmatpush.msra.mxu0 0.0
      %370 = vmatpush.msra.mxu0 0.0
      %371 = vmatpush.msra.mxu0 0.0
      %372 = vmatpush.msra.mxu0 0.0
      %373 = vmatpush.msra.mxu0 0.0
      %374 = vmatpush.msra.mxu0 0.0
      %375 = vmatpush.msra.mxu0 0.0
      %376 = vmatpush.msra.mxu0 0.0
      %377 = vmatpush.msra.mxu0 0.0
      %378 = vmatpush.msra.mxu0 0.0
      %379 = vmatpush.msra.mxu0 0.0
      %380 = vmatpush.msra.mxu0 0.0
      %381 = vmatpush.msra.mxu0 0.0
      %382 = vmatpush.msra.mxu0 0.0
      %383 = vmatpush.msra.mxu0 0.0
      %384 = vmatpush.msra.mxu0 %v347
      %385 = vmatmul.f32.gmra.mxu0 %v342
      %v386 = vpop.f32.mrf.mxu0
      %v387 = vadd.f32 %v334, %v386
      %388 = vdwg.mxu0
      %v389 = vld [vmem:[%s4] sm:$0x1f]
      %v390 = vld [vmem:[%s5] sm:$0x1f]
      %392 = vset.pattern.permute.xlu0 0
      %393 = vperm.xlu0 %392, %v390
      %v394 = vpop.permute.xlu0 %393
      %397 = vst [vmem:[#allocation1] ss:$2 sm:$0xff] %v328
      %v398 = vld.sshfl [vmem:[#allocation1] sm:$0xff pattern:$0x75316420]
      %v399 = vld.sshfl [vmem:[#allocation1 + $0x8] sm:$0xff pattern:$0x75316420]
      %v401 = vsel %vm340, %v389, 0
      %v403 = vsel %vm344, %v398, 0
      %v405 = vsel %vm344, %v399, 0
      %407 = vmatpush.msra.mxu0 0.0
      %408 = vmatpush.msra.mxu0 0.0
      %409 = vmatpush.msra.mxu0 0.0
      %410 = vmatpush.msra.mxu0 0.0
      %411 = vmatpush.msra.mxu0 0.0
      %412 = vmatpush.msra.mxu0 0.0
      %413 = vmatpush.msra.mxu0 0.0
      %414 = vmatpush.msra.mxu0 0.0
      %415 = vmatpush.msra.mxu0 0.0
      %416 = vmatpush.msra.mxu0 0.0
      %417 = vmatpush.msra.mxu0 0.0
      %418 = vmatpush.msra.mxu0 0.0
      %419 = vmatpush.msra.mxu0 0.0
      %420 = vmatpush.msra.mxu0 0.0
      %421 = vmatpush.msra.mxu0 0.0
      %422 = vmatpush.msra.mxu0 %v403
      %423 = vmatmul.f32.gmra.mxu0 %v401
      %v424 = vpop.f32.mrf.mxu0
      %v425 = vadd.f32 %v394, %v424
      %426 = vdwg.mxu0
      %427 = vmatpush.msra.mxu0 0.0
      %428 = vmatpush.msra.mxu0 0.0
      %429 = vmatpush.msra.mxu0 0.0
      %430 = vmatpush.msra.mxu0 0.0
      %431 = vmatpush.msra.mxu0 0.0
      %432 = vmatpush.msra.mxu0 0.0
      %433 = vmatpush.msra.mxu0 0.0
      %434 = vmatpush.msra.mxu0 0.0
      %435 = vmatpush.msra.mxu0 0.0
      %436 = vmatpush.msra.mxu0 0.0
      %437 = vmatpush.msra.mxu0 0.0
      %438 = vmatpush.msra.mxu0 0.0
      %439 = vmatpush.msra.mxu0 0.0
      %440 = vmatpush.msra.mxu0 0.0
      %441 = vmatpush.msra.mxu0 0.0
      %442 = vmatpush.msra.mxu0 %v405
      %443 = vmatmul.f32.gmra.mxu0 %v401
      %v444 = vpop.f32.mrf.mxu0
      %v445 = vadd.f32 %v394, %v444
      %446 = vdwg.mxu0
      %447 = vst [vmem:[%s325] sm:$0xff] %v367
      %448 = vst [vmem:[%s325 + $0x8] sm:$0xff] %v387
      %449 = vst [vmem:[%s325 + $0x10] sm:$0x1f] %v425
      %450 = vst [vmem:[%s325 + $0x18] sm:$0x1f] %v445
      %s451 = smul.u32 2, %s22
      %p452 = scmp.lt.s32.totalorder %s21, 1
      %s453 = scalar_select %p452, %s21, 1
      %p454 = scmp.lt.s32.totalorder %s451, 1
      %s455 = scalar_select %p454, %s451, 1
      %s456 = smul.addr %s453, 4
      %s457 = sadd.s32 %s455, %s456
      %s458 = smul.addr %s457, 8
      %s459 = scalar_lea.vmem %s6, %s458
      // Predicated region
      $region45: #{_single_level_pred_impl.1} parent=43 // pred_check
        %p460 = pneg %p189
      $region46: #{_single_level_pred_impl.1} parent=43 // pred_check_branch
        %462 = sbr.rel (%p460) target = $region48
      $region47: #{_single_level_pred_impl.1} parent=43 // pred_region
        %s463 = smul.u32 2, %s22
      $region48: #{_single_level_pred_impl.1} parent=43 // pred_fallthru
        _
    $region44: #{_single_level_pred_impl.1} parent=5 // pred_fallthru
      _
    %p464 = scmp.le.s32.totalorder 2, %s12
    // Predicated region
    $region49: #{_single_level_pred_impl.1} parent=5 // pred_check
      %p465 = pneg %p464
    $region50: #{_single_level_pred_impl.1} parent=5 // pred_check_branch
      %467 = sbr.rel (%p465) target = $region52
    $region51: #{_single_level_pred_impl.1} parent=5 // pred_region
      %s468 = ssub.s32 %s12, 2
      // Predicated region
      $region53: #{_single_level_pred_impl.1} parent=51 // pred_check
        %p469 = pneg %p195
      $region54: #{_single_level_pred_impl.1} parent=51 // pred_check_branch
        %471 = sbr.rel (%p469) target = $region56
      $region55: #{_single_level_pred_impl.1} parent=51 // pred_region
        %s472 = smul.u32 2, %s24
        %p473 = scmp.lt.s32.totalorder %s23, 1
        %s474 = scalar_select %p473, %s23, 1
        %p475 = scmp.lt.s32.totalorder %s472, 1
        %s476 = scalar_select %p475, %s472, 1
        %s477 = smul.addr %s474, 4
        %s478 = sadd.s32 %s476, %s477
        %s479 = smul.addr %s478, 8
        %s480 = scalar_lea.vmem %s6, %s479
      $region56: #{_single_level_pred_impl.1} parent=51 // pred_fallthru
        _
    $region52: #{_single_level_pred_impl.1} parent=5 // pred_fallthru
      _
  $region6: #{_single_level_pred_impl.1} parent=0 // loop_footer
    %s16 = sadd.s32 1, %s12
  $region7: #{_single_level_pred_impl.1} parent=0 // loop_footer_branch
    %11 = sbr.rel target = $region3
  $region8: #{_single_level_pred_impl.1} parent=0 // loop_exit
    _

</llo_original>
